<compile_context>
chip_gen: v7x
topology: tpu7x:2x2x1
jax: 0.10.0
libtpu: 0.0.40
codegen_flags: <defaults>
</compile_context>

<pallas_src>
import functools
import math

import jax
import jax.numpy as jnp
from jax.experimental import pallas as pl
from jax.experimental.pallas import tpu as pltpu


def _span_attn_kernel(x_ref, mask_ref, w_ref, b_ref, st_ref, ed_ref,
                      *, bt, t, h, r, max_rel):
    cd = x_ref.dtype                                    # MXU compute dtype (f32; bf16 on v6e/v7x)
    x = x_ref[...]                                      # (bt*T, H), already in compute dtype
    w = w_ref[...]                                      # (H, 4H + 2R)
    b = b_ref[...].astype(jnp.float32)                  # (1, 4H + 2R)

    # Hoisted once per block, shared by both heads and all bt batch elements.
    valid = mask_ref[...] != 0                          # (bt*T, T) bool (mask shipped as int8)

    # Hoisted once per block: clipped relative-distance index map (T, T), int32.
    qpos = jax.lax.broadcasted_iota(jnp.int32, (t, t), 0)
    kpos = jax.lax.broadcasted_iota(jnp.int32, (t, t), 1)
    rel_idx = jnp.clip(kpos - qpos, -max_rel, max_rel) + max_rel

    # One fused MXU matmul: [Q_st | K_st | Q_ed | K_ed | Rel_st | Rel_ed].
    # 1/sqrt(H) is already folded into the Q / Rel columns by the wrapper.
    proj = jnp.dot(x, w, preferred_element_type=jnp.float32) + b   # (bt*T, 4H+2R)

    neg_inf = jnp.float32(-1e18)
    # ((query-col, key-col, rel-col), output ref) for the st and ed attention heads.
    heads = (((0, h, 4 * h), st_ref), ((2 * h, 3 * h, 4 * h + r), ed_ref))

    # NOTE: bt is bounded by the wrapper (rows <= ~256) so this static unroll stays small.
    for bi in range(bt):
        lo, hi = bi * t, (bi + 1) * t
        pr = proj[lo:hi]                                # (T, 4H+2R)
        valid_b = valid[lo:hi]                          # (T, T)
        for (qc, kc, rc), o_ref in heads:
            q = pr[:, qc:qc + h]                        # (T, H), already scaled by 1/sqrt(H)
            k = pr[:, kc:kc + h]                        # (T, H)
            rl = pr[:, rc:rc + r]                       # (T, R) relative logits
            # content scores on the MXU: contract over H -> (T, T), f32 accumulation
            content = jax.lax.dot_general(
                q.astype(cd), k.astype(cd), (((1,), (1,)), ((), ())),
                preferred_element_type=jnp.float32)
            # expand relative logits (T, R) -> (T, T) band via R where-passes (no (T,T,R) tensor)
            rel = jnp.zeros((t, t), jnp.float32)
            for ri in range(r):
                rel = jnp.where(rel_idx == ri, rl[:, ri:ri + 1], rel)
            s = jnp.where(valid_b, content + rel, neg_inf)
            s = s - jnp.max(s, axis=-1, keepdims=True)
            e = jnp.exp(s)
            denom = jnp.sum(e, axis=-1, keepdims=True)
            inv = pl.reciprocal(denom, approx=True)     # EUP slot (essentially free)
            inv = inv * (2.0 - denom * inv)             # one Newton step -> f32 accuracy
            o_ref[lo:hi, :] = (e * inv).astype(o_ref.dtype)   # direct per-head store


def span_classifier_forward(repre, mask, params, max_relative_position,
                            *, block_batch=None, param_dtype=jnp.float32,
                            out_dtype=jnp.float32):
    """repre: (B, T, H) float; mask: (B, T, T) (nonzero = attendable position).

    Set param_dtype=jnp.bfloat16 on v6e/v7x for full-rate MXU (f32 accumulation kept);
    out_dtype=jnp.bfloat16 halves output HBM traffic if downstream tolerates it.
    """
    B, T, H = repre.shape
    R = 2 * max_relative_position + 1
    C = 4 * H + 2 * R
    scale = 1.0 / math.sqrt(H)

    relk_t = params["rel_key_emb"].T.astype(jnp.float32)          # (H, R)

    # Fold the 1/sqrt(H) query scaling into the Q weights (applies to both the
    # content and relative terms, matching the reference's post-projection scaling).
    wq_st = params["st_wq"] * scale
    bq_st = params["st_bq"] * scale
    wq_ed = params["ed_wq"] * scale
    bq_ed = params["ed_bq"] * scale

    # Fused weight / bias: [Q_st | K_st | Q_ed | K_ed | Rel_st | Rel_ed].
    w_full = jnp.concatenate(
        [wq_st, params["st_wk"], wq_ed, params["ed_wk"],
         wq_st @ relk_t, wq_ed @ relk_t], axis=1).astype(param_dtype)   # (H, 4H+2R)
    b_full = jnp.concatenate(
        [bq_st, params["st_bk"], bq_ed, params["ed_bk"],
         bq_st @ relk_t, bq_ed @ relk_t], axis=1).astype(jnp.float32)   # (1, 4H+2R)

    # Batches per grid step: fill the MXU M dimension (target 256 rows for v6e/v7x's
    # 256-wide MXU; harmless on v5e) while keeping sublane-aligned row blocks (x32
    # covers f32/bf16/int8 block constraints) and bt | B.  A full-batch block is
    # always legal (block == full array).
    if block_batch is None:
        target_rows = 256
        legal = [c for c in range(1, B + 1)
                 if B % c == 0 and (c == B or (c * T) % 32 == 0)]
        fitting = [c for c in legal if c * T <= target_rows]
        bt = max(fitting) if fitting else min(legal)
    else:
        bt = block_batch
    assert B % bt == 0, "block_batch must divide the batch size"
    rows = bt * T
    # Future work: for very large T a query-tiled grid axis is needed so the per-step
    # (rows, T) score tiles stay within v7x's 64 MiB VMEM.

    # Lane-dense 2-D slabs for the kernel; mask shipped as int8 (4x less DMA).
    x2 = repre.reshape(B * T, H).astype(param_dtype)
    m2 = (mask > 0).astype(jnp.int8).reshape(B * T, T)

    kernel = functools.partial(_span_attn_kernel, bt=bt, t=T, h=H, r=R,
                               max_rel=max_relative_position)

    # Rough per-step working-set estimate -> scoped VMEM limit (defaults 16/32 MiB
    # are too low for moderate T even when physical VMEM is fine).
    x_bytes = jnp.dtype(param_dtype).itemsize
    o_bytes = jnp.dtype(out_dtype).itemsize
    est = (2 * rows * H * x_bytes            # repre block, double-buffered
           + 2 * rows * T                    # int8 mask block, double-buffered
           + 2 * (H * C * x_bytes + C * 4)   # fused weights / bias (double-buffered)
           + 2 * 2 * rows * T * o_bytes      # two output blocks, double-buffered
           + rows * C * 4                    # proj
           + 8 * T * T * 4)                  # score / exp / rel working tiles
    vmem_limit = int(min(64 * 2 ** 20, max(32 * 2 ** 20, 2 * est)))

    grid_spec = pltpu.PrefetchScalarGridSpec(
        num_scalar_prefetch=0,
        grid=(B // bt,),
        in_specs=[
            pl.BlockSpec((rows, H), lambda i: (i, 0)),       # repre rows
            pl.BlockSpec((rows, T), lambda i: (i, 0)),       # int8 mask rows
            pl.BlockSpec((H, C), lambda i: (0, 0)),          # fused weights (resident)
            pl.BlockSpec((1, C), lambda i: (0, 0)),          # fused biases (resident)
        ],
        out_specs=[
            pl.BlockSpec((rows, T), lambda i: (i, 0)),       # st distribution
            pl.BlockSpec((rows, T), lambda i: (i, 0)),       # ed distribution
        ],
    )

    fn = pl.pallas_call(
        kernel,
        grid_spec=grid_spec,
        out_shape=(jax.ShapeDtypeStruct((B * T, T), out_dtype),
                   jax.ShapeDtypeStruct((B * T, T), out_dtype)),
        compiler_params=pltpu.CompilerParams(
            dimension_semantics=("parallel",),
            vmem_limit_bytes=vmem_limit),
    )

    st2, ed2 = fn(x2, m2, w_full, b_full)
    return st2.reshape(B, T, T), ed2.reshape(B, T, T)


def _init_params(key, hidden_dim, max_relative_position):
    """Deterministic synthetic params. Linear stored as (in, out): y = x @ W + b."""
    bound = 1.0 / math.sqrt(hidden_dim)
    ks = jax.random.split(key, 9)

    def lin(k):
        kw, kb = jax.random.split(k)
        w = jax.random.uniform(kw, (hidden_dim, hidden_dim), jnp.float32, -bound, bound)
        b = jax.random.uniform(kb, (1, hidden_dim), jnp.float32, -bound, bound)
        return w, b

    st_wq, st_bq = lin(ks[0]); st_wk, st_bk = lin(ks[1])
    ed_wq, ed_bq = lin(ks[2]); ed_wk, ed_bk = lin(ks[3])
    rel_key_emb = jax.random.normal(
        ks[4], (2 * max_relative_position + 1, hidden_dim), jnp.float32) * 0.02
    return dict(st_wq=st_wq, st_bq=st_bq, st_wk=st_wk, st_bk=st_bk,
                ed_wq=ed_wq, ed_bq=ed_bq, ed_wk=ed_wk, ed_bk=ed_bk,
                rel_key_emb=rel_key_emb)


def _reference(repre, mask, params, max_rel):
    """Pure-JAX reference for correctness check."""
    B, T, H = repre.shape
    qpos = jnp.arange(T)[:, None]; kpos = jnp.arange(T)[None, :]
    rel_idx = jnp.clip(kpos - qpos, -max_rel, max_rel) + max_rel
    relk = params["rel_key_emb"][rel_idx]

    def attn(wq, bq, wk, bk):
        q = (repre @ wq + bq) / math.sqrt(H)
        k = repre @ wk + bk
        scores = jnp.einsum("bqh,bkh->bqk", q, k)
        scores = scores + jnp.einsum("bqh,qkh->bqk", q, relk)
        scores = jnp.where(mask > 0.0, scores, -1e18)
        return jax.nn.softmax(scores, axis=-1)

    st = attn(params["st_wq"], params["st_bq"], params["st_wk"], params["st_bk"])
    ed = attn(params["ed_wq"], params["ed_bq"], params["ed_wk"], params["ed_bk"])
    return st, ed


if __name__ == "__main__":
    B, T, H = 2, 8, 32
    MAX_REL = 4

    key = jax.random.PRNGKey(0)
    k_x, k_p = jax.random.split(key)

    repre = jax.random.normal(k_x, (B, T, H), jnp.float32)

    # mask: (B, T, T) — last two key positions of batch 1 are padding
    lengths = jnp.array([T, T - 2])
    valid = (jnp.arange(T)[None, :] < lengths[:, None]).astype(jnp.float32)  # (B, T)
    mask = valid[:, None, :] * jnp.ones((B, T, 1), jnp.float32)              # (B, T, T)

    params = _init_params(k_p, H, MAX_REL)

    st_dist, ed_dist = span_classifier_forward(repre, mask, params, MAX_REL)
    st_dist, ed_dist = jax.block_until_ready((st_dist, ed_dist))

    st_ref, ed_ref = _reference(repre, mask, params, MAX_REL)
    # 1e-4 tolerance: the softmax normalization uses the EUP approximate
    # reciprocal refined by one Newton step (error << 1e-4 on probabilities).
    assert jnp.allclose(st_dist, st_ref, atol=1e-4, rtol=1e-4), \
        float(jnp.max(jnp.abs(st_dist - st_ref)))
    assert jnp.allclose(ed_dist, ed_ref, atol=1e-4, rtol=1e-4), \
        float(jnp.max(jnp.abs(ed_dist - ed_ref)))

    print("KERNEL_OK")
</pallas_src>

<mosaic_0001>
module attributes {stable_mosaic.version = 11 : i64} {
  func.func @_span_attn_kernel(%arg0: i32, %arg1: memref<16x32xf32, #tpu.memory_space<vmem>>, %arg2: memref<16x8xi8, #tpu.memory_space<vmem>>, %arg3: memref<32x146xf32, #tpu.memory_space<vmem>>, %arg4: memref<1x146xf32, #tpu.memory_space<vmem>>, %arg5: memref<16x8xf32, #tpu.memory_space<vmem>>, %arg6: memref<16x8xf32, #tpu.memory_space<vmem>>) attributes {dimension_semantics = [#tpu.dimension_semantics<parallel>], iteration_bounds = array<i64: 1>, scalar_prefetch = 0 : i64, scratch_operands = 0 : i64, tpu.core_type = #tpu.core_type<tc>, window_params = [{transform_indices = @transform_0, window_bounds = array<i64: 16, 32>}, {transform_indices = @transform_1, window_bounds = array<i64: 16, 8>}, {pipeline_mode = #tpu.pipeline_mode<synchronous>, transform_indices = @transform_2, window_bounds = array<i64: 32, 146>}, {pipeline_mode = #tpu.pipeline_mode<synchronous>, transform_indices = @transform_3, window_bounds = array<i64: 1, 146>}, {transform_indices = @transform_4, window_bounds = array<i64: 16, 8>}, {transform_indices = @transform_5, window_bounds = array<i64: 16, 8>}]} {
    %c0 = arith.constant 0 : index
    %c0_0 = arith.constant 0 : index
    %0 = vector.load %arg1[%c0, %c0_0] : memref<16x32xf32, #tpu.memory_space<vmem>>, vector<16x32xf32>
    %c0_1 = arith.constant 0 : index
    %c0_2 = arith.constant 0 : index
    %1 = vector.load %arg3[%c0_1, %c0_2] : memref<32x146xf32, #tpu.memory_space<vmem>>, vector<32x146xf32>
    %c0_3 = arith.constant 0 : index
    %c0_4 = arith.constant 0 : index
    %2 = vector.load %arg4[%c0_3, %c0_4] : memref<1x146xf32, #tpu.memory_space<vmem>>, vector<1x146xf32>
    %c0_5 = arith.constant 0 : index
    %c0_6 = arith.constant 0 : index
    %3 = vector.load %arg2[%c0_5, %c0_6] : memref<16x8xi8, #tpu.memory_space<vmem>>, vector<16x8xi8>
    %c0_i8 = arith.constant 0 : i8
    %4 = vector.broadcast %c0_i8 : i8 to vector<16x8xi8>
    %5 = arith.cmpi ne, %3, %4 : vector<16x8xi8>
    %6 = tpu.iota {dimensions = array<i32: 0>} : vector<8x8xi32>
    %7 = tpu.iota {dimensions = array<i32: 1>} : vector<8x8xi32>
    %8 = arith.subi %7, %6 : vector<8x8xi32>
    %c-4_i32 = arith.constant -4 : i32
    %c4_i32 = arith.constant 4 : i32
    %9 = vector.broadcast %c-4_i32 : i32 to vector<8x8xi32>
    %10 = arith.maxsi %9, %8 : vector<8x8xi32>
    %11 = vector.broadcast %c4_i32 : i32 to vector<8x8xi32>
    %12 = arith.minsi %11, %10 : vector<8x8xi32>
    %c4_i32_7 = arith.constant 4 : i32
    %13 = vector.broadcast %c4_i32_7 : i32 to vector<8x8xi32>
    %14 = arith.addi %12, %13 : vector<8x8xi32>
    %cst = arith.constant dense<0.000000e+00> : vector<16x146xf32>
    %15 = tpu.matmul %0, %1, %cst {dimension_numbers = #tpu.dot_dimension_numbers<[1], [0], [0], [1], [0, 0, 1, 1], [], []>} : vector<16x32xf32>, vector<32x146xf32>, vector<16x146xf32> -> vector<16x146xf32>
    %16 = vector.broadcast %2 : vector<1x146xf32> to vector<16x146xf32>
    %17 = arith.addf %15, %16 : vector<16x146xf32>
    %18 = vector.extract_strided_slice %17 {offsets = [0, 0], sizes = [8, 146], strides = [1, 1]} : vector<16x146xf32> to vector<8x146xf32>
    %19 = vector.extract_strided_slice %5 {offsets = [0, 0], sizes = [8, 8], strides = [1, 1]} : vector<16x8xi1> to vector<8x8xi1>
    %20 = vector.extract_strided_slice %18 {offsets = [0, 0], sizes = [8, 32], strides = [1, 1]} : vector<8x146xf32> to vector<8x32xf32>
    %21 = vector.extract_strided_slice %18 {offsets = [0, 32], sizes = [8, 32], strides = [1, 1]} : vector<8x146xf32> to vector<8x32xf32>
    %22 = vector.extract_strided_slice %18 {offsets = [0, 128], sizes = [8, 9], strides = [1, 1]} : vector<8x146xf32> to vector<8x9xf32>
    %cst_8 = arith.constant dense<0.000000e+00> : vector<8x8xf32>
    %23 = tpu.matmul %20, %21, %cst_8 {dimension_numbers = #tpu.dot_dimension_numbers<[1], [1], [0], [0], [0, 0, 1, 0], [], []>} : vector<8x32xf32>, vector<8x32xf32>, vector<8x8xf32> -> vector<8x8xf32>
    %cst_9 = arith.constant 0.000000e+00 : f32
    %24 = vector.broadcast %cst_9 : f32 to vector<8x8xf32>
    %c0_i32 = arith.constant 0 : i32
    %25 = vector.broadcast %c0_i32 : i32 to vector<8x8xi32>
    %26 = arith.cmpi eq, %14, %25 : vector<8x8xi32>
    %27 = vector.extract_strided_slice %22 {offsets = [0, 0], sizes = [8, 1], strides = [1, 1]} : vector<8x9xf32> to vector<8x1xf32>
    %28 = vector.shape_cast %27 : vector<8x1xf32> to vector<8x1xf32>
    %29 = vector.broadcast %28 : vector<8x1xf32> to vector<8x8xf32>
    %30 = arith.select %26, %29, %24 : vector<8x8xi1>, vector<8x8xf32>
    %c1_i32 = arith.constant 1 : i32
    %31 = vector.broadcast %c1_i32 : i32 to vector<8x8xi32>
    %32 = arith.cmpi eq, %14, %31 : vector<8x8xi32>
    %33 = vector.extract_strided_slice %22 {offsets = [0, 1], sizes = [8, 1], strides = [1, 1]} : vector<8x9xf32> to vector<8x1xf32>
    %34 = vector.shape_cast %33 : vector<8x1xf32> to vector<8x1xf32>
    %35 = vector.broadcast %34 : vector<8x1xf32> to vector<8x8xf32>
    %36 = arith.select %32, %35, %30 : vector<8x8xi1>, vector<8x8xf32>
    %c2_i32 = arith.constant 2 : i32
    %37 = vector.broadcast %c2_i32 : i32 to vector<8x8xi32>
    %38 = arith.cmpi eq, %14, %37 : vector<8x8xi32>
    %39 = vector.extract_strided_slice %22 {offsets = [0, 2], sizes = [8, 1], strides = [1, 1]} : vector<8x9xf32> to vector<8x1xf32>
    %40 = vector.shape_cast %39 : vector<8x1xf32> to vector<8x1xf32>
    %41 = vector.broadcast %40 : vector<8x1xf32> to vector<8x8xf32>
    %42 = arith.select %38, %41, %36 : vector<8x8xi1>, vector<8x8xf32>
    %c3_i32 = arith.constant 3 : i32
    %43 = vector.broadcast %c3_i32 : i32 to vector<8x8xi32>
    %44 = arith.cmpi eq, %14, %43 : vector<8x8xi32>
    %45 = vector.extract_strided_slice %22 {offsets = [0, 3], sizes = [8, 1], strides = [1, 1]} : vector<8x9xf32> to vector<8x1xf32>
    %46 = vector.shape_cast %45 : vector<8x1xf32> to vector<8x1xf32>
    %47 = vector.broadcast %46 : vector<8x1xf32> to vector<8x8xf32>
    %48 = arith.select %44, %47, %42 : vector<8x8xi1>, vector<8x8xf32>
    %c4_i32_10 = arith.constant 4 : i32
    %49 = vector.broadcast %c4_i32_10 : i32 to vector<8x8xi32>
    %50 = arith.cmpi eq, %14, %49 : vector<8x8xi32>
    %51 = vector.extract_strided_slice %22 {offsets = [0, 4], sizes = [8, 1], strides = [1, 1]} : vector<8x9xf32> to vector<8x1xf32>
    %52 = vector.shape_cast %51 : vector<8x1xf32> to vector<8x1xf32>
    %53 = vector.broadcast %52 : vector<8x1xf32> to vector<8x8xf32>
    %54 = arith.select %50, %53, %48 : vector<8x8xi1>, vector<8x8xf32>
    %c5_i32 = arith.constant 5 : i32
    %55 = vector.broadcast %c5_i32 : i32 to vector<8x8xi32>
    %56 = arith.cmpi eq, %14, %55 : vector<8x8xi32>
    %57 = vector.extract_strided_slice %22 {offsets = [0, 5], sizes = [8, 1], strides = [1, 1]} : vector<8x9xf32> to vector<8x1xf32>
    %58 = vector.shape_cast %57 : vector<8x1xf32> to vector<8x1xf32>
    %59 = vector.broadcast %58 : vector<8x1xf32> to vector<8x8xf32>
    %60 = arith.select %56, %59, %54 : vector<8x8xi1>, vector<8x8xf32>
    %c6_i32 = arith.constant 6 : i32
    %61 = vector.broadcast %c6_i32 : i32 to vector<8x8xi32>
    %62 = arith.cmpi eq, %14, %61 : vector<8x8xi32>
    %63 = vector.extract_strided_slice %22 {offsets = [0, 6], sizes = [8, 1], strides = [1, 1]} : vector<8x9xf32> to vector<8x1xf32>
    %64 = vector.shape_cast %63 : vector<8x1xf32> to vector<8x1xf32>
    %65 = vector.broadcast %64 : vector<8x1xf32> to vector<8x8xf32>
    %66 = arith.select %62, %65, %60 : vector<8x8xi1>, vector<8x8xf32>
    %c7_i32 = arith.constant 7 : i32
    %67 = vector.broadcast %c7_i32 : i32 to vector<8x8xi32>
    %68 = arith.cmpi eq, %14, %67 : vector<8x8xi32>
    %69 = vector.extract_strided_slice %22 {offsets = [0, 7], sizes = [8, 1], strides = [1, 1]} : vector<8x9xf32> to vector<8x1xf32>
    %70 = vector.shape_cast %69 : vector<8x1xf32> to vector<8x1xf32>
    %71 = vector.broadcast %70 : vector<8x1xf32> to vector<8x8xf32>
    %72 = arith.select %68, %71, %66 : vector<8x8xi1>, vector<8x8xf32>
    %c8_i32 = arith.constant 8 : i32
    %73 = vector.broadcast %c8_i32 : i32 to vector<8x8xi32>
    %74 = arith.cmpi eq, %14, %73 : vector<8x8xi32>
    %75 = vector.extract_strided_slice %22 {offsets = [0, 8], sizes = [8, 1], strides = [1, 1]} : vector<8x9xf32> to vector<8x1xf32>
    %76 = vector.shape_cast %75 : vector<8x1xf32> to vector<8x1xf32>
    %77 = vector.broadcast %76 : vector<8x1xf32> to vector<8x8xf32>
    %78 = arith.select %74, %77, %72 : vector<8x8xi1>, vector<8x8xf32>
    %79 = arith.addf %23, %78 : vector<8x8xf32>
    %cst_11 = arith.constant -9.99999984E+17 : f32
    %80 = vector.broadcast %cst_11 : f32 to vector<8x8xf32>
    %81 = arith.select %19, %79, %80 : vector<8x8xi1>, vector<8x8xf32>
    %cst_12 = arith.constant dense<0xFF800000> : vector<8xf32>
    %82 = vector.multi_reduction <maximumf>, %81, %cst_12 [1] : vector<8x8xf32> to vector<8xf32>
    %83 = vector.shape_cast %82 : vector<8xf32> to vector<8x1xf32>
    %84 = vector.broadcast %83 : vector<8x1xf32> to vector<8x8xf32>
    %85 = arith.subf %81, %84 : vector<8x8xf32>
    %86 = math.exp %85 : vector<8x8xf32>
    %cst_13 = arith.constant dense<0.000000e+00> : vector<8xf32>
    %87 = vector.multi_reduction <add>, %86, %cst_13 [1] : vector<8x8xf32> to vector<8xf32>
    %88 = vector.shape_cast %87 : vector<8xf32> to vector<8x1xf32>
    %89 = tpu.reciprocal %88 {approx = true} : vector<8x1xf32> -> vector<8x1xf32>
    %90 = arith.mulf %88, %89 : vector<8x1xf32>
    %cst_14 = arith.constant 2.000000e+00 : f32
    %91 = vector.broadcast %cst_14 : f32 to vector<8x1xf32>
    %92 = arith.subf %91, %90 : vector<8x1xf32>
    %93 = arith.mulf %89, %92 : vector<8x1xf32>
    %94 = vector.broadcast %93 : vector<8x1xf32> to vector<8x8xf32>
    %95 = arith.mulf %86, %94 : vector<8x8xf32>
    %c0_15 = arith.constant 0 : index
    %c0_16 = arith.constant 0 : index
    %96 = vector.load %arg5[%c0_15, %c0_16] : memref<16x8xf32, #tpu.memory_space<vmem>>, vector<8x8xf32>
    tpu.vector_store %arg5[%c0_15, %c0_16], %95 {strides = array<i32>} : memref<16x8xf32, #tpu.memory_space<vmem>>, vector<8x8xf32>,
    %97 = vector.extract_strided_slice %18 {offsets = [0, 64], sizes = [8, 32], strides = [1, 1]} : vector<8x146xf32> to vector<8x32xf32>
    %98 = vector.extract_strided_slice %18 {offsets = [0, 96], sizes = [8, 32], strides = [1, 1]} : vector<8x146xf32> to vector<8x32xf32>
    %99 = vector.extract_strided_slice %18 {offsets = [0, 137], sizes = [8, 9], strides = [1, 1]} : vector<8x146xf32> to vector<8x9xf32>
    %cst_17 = arith.constant dense<0.000000e+00> : vector<8x8xf32>
    %100 = tpu.matmul %97, %98, %cst_17 {dimension_numbers = #tpu.dot_dimension_numbers<[1], [1], [0], [0], [0, 0, 1, 0], [], []>} : vector<8x32xf32>, vector<8x32xf32>, vector<8x8xf32> -> vector<8x8xf32>
    %cst_18 = arith.constant 0.000000e+00 : f32
    %101 = vector.broadcast %cst_18 : f32 to vector<8x8xf32>
    %c0_i32_19 = arith.constant 0 : i32
    %102 = vector.broadcast %c0_i32_19 : i32 to vector<8x8xi32>
    %103 = arith.cmpi eq, %14, %102 : vector<8x8xi32>
    %104 = vector.extract_strided_slice %99 {offsets = [0, 0], sizes = [8, 1], strides = [1, 1]} : vector<8x9xf32> to vector<8x1xf32>
    %105 = vector.shape_cast %104 : vector<8x1xf32> to vector<8x1xf32>
    %106 = vector.broadcast %105 : vector<8x1xf32> to vector<8x8xf32>
    %107 = arith.select %103, %106, %101 : vector<8x8xi1>, vector<8x8xf32>
    %c1_i32_20 = arith.constant 1 : i32
    %108 = vector.broadcast %c1_i32_20 : i32 to vector<8x8xi32>
    %109 = arith.cmpi eq, %14, %108 : vector<8x8xi32>
    %110 = vector.extract_strided_slice %99 {offsets = [0, 1], sizes = [8, 1], strides = [1, 1]} : vector<8x9xf32> to vector<8x1xf32>
    %111 = vector.shape_cast %110 : vector<8x1xf32> to vector<8x1xf32>
    %112 = vector.broadcast %111 : vector<8x1xf32> to vector<8x8xf32>
    %113 = arith.select %109, %112, %107 : vector<8x8xi1>, vector<8x8xf32>
    %c2_i32_21 = arith.constant 2 : i32
    %114 = vector.broadcast %c2_i32_21 : i32 to vector<8x8xi32>
    %115 = arith.cmpi eq, %14, %114 : vector<8x8xi32>
    %116 = vector.extract_strided_slice %99 {offsets = [0, 2], sizes = [8, 1], strides = [1, 1]} : vector<8x9xf32> to vector<8x1xf32>
    %117 = vector.shape_cast %116 : vector<8x1xf32> to vector<8x1xf32>
    %118 = vector.broadcast %117 : vector<8x1xf32> to vector<8x8xf32>
    %119 = arith.select %115, %118, %113 : vector<8x8xi1>, vector<8x8xf32>
    %c3_i32_22 = arith.constant 3 : i32
    %120 = vector.broadcast %c3_i32_22 : i32 to vector<8x8xi32>
    %121 = arith.cmpi eq, %14, %120 : vector<8x8xi32>
    %122 = vector.extract_strided_slice %99 {offsets = [0, 3], sizes = [8, 1], strides = [1, 1]} : vector<8x9xf32> to vector<8x1xf32>
    %123 = vector.shape_cast %122 : vector<8x1xf32> to vector<8x1xf32>
    %124 = vector.broadcast %123 : vector<8x1xf32> to vector<8x8xf32>
    %125 = arith.select %121, %124, %119 : vector<8x8xi1>, vector<8x8xf32>
    %c4_i32_23 = arith.constant 4 : i32
    %126 = vector.broadcast %c4_i32_23 : i32 to vector<8x8xi32>
    %127 = arith.cmpi eq, %14, %126 : vector<8x8xi32>
    %128 = vector.extract_strided_slice %99 {offsets = [0, 4], sizes = [8, 1], strides = [1, 1]} : vector<8x9xf32> to vector<8x1xf32>
    %129 = vector.shape_cast %128 : vector<8x1xf32> to vector<8x1xf32>
    %130 = vector.broadcast %129 : vector<8x1xf32> to vector<8x8xf32>
    %131 = arith.select %127, %130, %125 : vector<8x8xi1>, vector<8x8xf32>
    %c5_i32_24 = arith.constant 5 : i32
    %132 = vector.broadcast %c5_i32_24 : i32 to vector<8x8xi32>
    %133 = arith.cmpi eq, %14, %132 : vector<8x8xi32>
    %134 = vector.extract_strided_slice %99 {offsets = [0, 5], sizes = [8, 1], strides = [1, 1]} : vector<8x9xf32> to vector<8x1xf32>
    %135 = vector.shape_cast %134 : vector<8x1xf32> to vector<8x1xf32>
    %136 = vector.broadcast %135 : vector<8x1xf32> to vector<8x8xf32>
    %137 = arith.select %133, %136, %131 : vector<8x8xi1>, vector<8x8xf32>
    %c6_i32_25 = arith.constant 6 : i32
    %138 = vector.broadcast %c6_i32_25 : i32 to vector<8x8xi32>
    %139 = arith.cmpi eq, %14, %138 : vector<8x8xi32>
    %140 = vector.extract_strided_slice %99 {offsets = [0, 6], sizes = [8, 1], strides = [1, 1]} : vector<8x9xf32> to vector<8x1xf32>
    %141 = vector.shape_cast %140 : vector<8x1xf32> to vector<8x1xf32>
    %142 = vector.broadcast %141 : vector<8x1xf32> to vector<8x8xf32>
    %143 = arith.select %139, %142, %137 : vector<8x8xi1>, vector<8x8xf32>
    %c7_i32_26 = arith.constant 7 : i32
    %144 = vector.broadcast %c7_i32_26 : i32 to vector<8x8xi32>
    %145 = arith.cmpi eq, %14, %144 : vector<8x8xi32>
    %146 = vector.extract_strided_slice %99 {offsets = [0, 7], sizes = [8, 1], strides = [1, 1]} : vector<8x9xf32> to vector<8x1xf32>
    %147 = vector.shape_cast %146 : vector<8x1xf32> to vector<8x1xf32>
    %148 = vector.broadcast %147 : vector<8x1xf32> to vector<8x8xf32>
    %149 = arith.select %145, %148, %143 : vector<8x8xi1>, vector<8x8xf32>
    %c8_i32_27 = arith.constant 8 : i32
    %150 = vector.broadcast %c8_i32_27 : i32 to vector<8x8xi32>
    %151 = arith.cmpi eq, %14, %150 : vector<8x8xi32>
    %152 = vector.extract_strided_slice %99 {offsets = [0, 8], sizes = [8, 1], strides = [1, 1]} : vector<8x9xf32> to vector<8x1xf32>
    %153 = vector.shape_cast %152 : vector<8x1xf32> to vector<8x1xf32>
    %154 = vector.broadcast %153 : vector<8x1xf32> to vector<8x8xf32>
    %155 = arith.select %151, %154, %149 : vector<8x8xi1>, vector<8x8xf32>
    %156 = arith.addf %100, %155 : vector<8x8xf32>
    %cst_28 = arith.constant -9.99999984E+17 : f32
    %157 = vector.broadcast %cst_28 : f32 to vector<8x8xf32>
    %158 = arith.select %19, %156, %157 : vector<8x8xi1>, vector<8x8xf32>
    %cst_29 = arith.constant dense<0xFF800000> : vector<8xf32>
    %159 = vector.multi_reduction <maximumf>, %158, %cst_29 [1] : vector<8x8xf32> to vector<8xf32>
    %160 = vector.shape_cast %159 : vector<8xf32> to vector<8x1xf32>
    %161 = vector.broadcast %160 : vector<8x1xf32> to vector<8x8xf32>
    %162 = arith.subf %158, %161 : vector<8x8xf32>
    %163 = math.exp %162 : vector<8x8xf32>
    %cst_30 = arith.constant dense<0.000000e+00> : vector<8xf32>
    %164 = vector.multi_reduction <add>, %163, %cst_30 [1] : vector<8x8xf32> to vector<8xf32>
    %165 = vector.shape_cast %164 : vector<8xf32> to vector<8x1xf32>
    %166 = tpu.reciprocal %165 {approx = true} : vector<8x1xf32> -> vector<8x1xf32>
    %167 = arith.mulf %165, %166 : vector<8x1xf32>
    %cst_31 = arith.constant 2.000000e+00 : f32
    %168 = vector.broadcast %cst_31 : f32 to vector<8x1xf32>
    %169 = arith.subf %168, %167 : vector<8x1xf32>
    %170 = arith.mulf %166, %169 : vector<8x1xf32>
    %171 = vector.broadcast %170 : vector<8x1xf32> to vector<8x8xf32>
    %172 = arith.mulf %163, %171 : vector<8x8xf32>
    %c0_32 = arith.constant 0 : index
    %c0_33 = arith.constant 0 : index
    %173 = vector.load %arg6[%c0_32, %c0_33] : memref<16x8xf32, #tpu.memory_space<vmem>>, vector<8x8xf32>
    tpu.vector_store %arg6[%c0_32, %c0_33], %172 {strides = array<i32>} : memref<16x8xf32, #tpu.memory_space<vmem>>, vector<8x8xf32>,
    %174 = vector.extract_strided_slice %17 {offsets = [8, 0], sizes = [8, 146], strides = [1, 1]} : vector<16x146xf32> to vector<8x146xf32>
    %175 = vector.extract_strided_slice %5 {offsets = [8, 0], sizes = [8, 8], strides = [1, 1]} : vector<16x8xi1> to vector<8x8xi1>
    %176 = vector.extract_strided_slice %174 {offsets = [0, 0], sizes = [8, 32], strides = [1, 1]} : vector<8x146xf32> to vector<8x32xf32>
    %177 = vector.extract_strided_slice %174 {offsets = [0, 32], sizes = [8, 32], strides = [1, 1]} : vector<8x146xf32> to vector<8x32xf32>
    %178 = vector.extract_strided_slice %174 {offsets = [0, 128], sizes = [8, 9], strides = [1, 1]} : vector<8x146xf32> to vector<8x9xf32>
    %cst_34 = arith.constant dense<0.000000e+00> : vector<8x8xf32>
    %179 = tpu.matmul %176, %177, %cst_34 {dimension_numbers = #tpu.dot_dimension_numbers<[1], [1], [0], [0], [0, 0, 1, 0], [], []>} : vector<8x32xf32>, vector<8x32xf32>, vector<8x8xf32> -> vector<8x8xf32>
    %cst_35 = arith.constant 0.000000e+00 : f32
    %180 = vector.broadcast %cst_35 : f32 to vector<8x8xf32>
    %c0_i32_36 = arith.constant 0 : i32
    %181 = vector.broadcast %c0_i32_36 : i32 to vector<8x8xi32>
    %182 = arith.cmpi eq, %14, %181 : vector<8x8xi32>
    %183 = vector.extract_strided_slice %178 {offsets = [0, 0], sizes = [8, 1], strides = [1, 1]} : vector<8x9xf32> to vector<8x1xf32>
    %184 = vector.shape_cast %183 : vector<8x1xf32> to vector<8x1xf32>
    %185 = vector.broadcast %184 : vector<8x1xf32> to vector<8x8xf32>
    %186 = arith.select %182, %185, %180 : vector<8x8xi1>, vector<8x8xf32>
    %c1_i32_37 = arith.constant 1 : i32
    %187 = vector.broadcast %c1_i32_37 : i32 to vector<8x8xi32>
    %188 = arith.cmpi eq, %14, %187 : vector<8x8xi32>
    %189 = vector.extract_strided_slice %178 {offsets = [0, 1], sizes = [8, 1], strides = [1, 1]} : vector<8x9xf32> to vector<8x1xf32>
    %190 = vector.shape_cast %189 : vector<8x1xf32> to vector<8x1xf32>
    %191 = vector.broadcast %190 : vector<8x1xf32> to vector<8x8xf32>
    %192 = arith.select %188, %191, %186 : vector<8x8xi1>, vector<8x8xf32>
    %c2_i32_38 = arith.constant 2 : i32
    %193 = vector.broadcast %c2_i32_38 : i32 to vector<8x8xi32>
    %194 = arith.cmpi eq, %14, %193 : vector<8x8xi32>
    %195 = vector.extract_strided_slice %178 {offsets = [0, 2], sizes = [8, 1], strides = [1, 1]} : vector<8x9xf32> to vector<8x1xf32>
    %196 = vector.shape_cast %195 : vector<8x1xf32> to vector<8x1xf32>
    %197 = vector.broadcast %196 : vector<8x1xf32> to vector<8x8xf32>
    %198 = arith.select %194, %197, %192 : vector<8x8xi1>, vector<8x8xf32>
    %c3_i32_39 = arith.constant 3 : i32
    %199 = vector.broadcast %c3_i32_39 : i32 to vector<8x8xi32>
    %200 = arith.cmpi eq, %14, %199 : vector<8x8xi32>
    %201 = vector.extract_strided_slice %178 {offsets = [0, 3], sizes = [8, 1], strides = [1, 1]} : vector<8x9xf32> to vector<8x1xf32>
    %202 = vector.shape_cast %201 : vector<8x1xf32> to vector<8x1xf32>
    %203 = vector.broadcast %202 : vector<8x1xf32> to vector<8x8xf32>
    %204 = arith.select %200, %203, %198 : vector<8x8xi1>, vector<8x8xf32>
    %c4_i32_40 = arith.constant 4 : i32
    %205 = vector.broadcast %c4_i32_40 : i32 to vector<8x8xi32>
    %206 = arith.cmpi eq, %14, %205 : vector<8x8xi32>
    %207 = vector.extract_strided_slice %178 {offsets = [0, 4], sizes = [8, 1], strides = [1, 1]} : vector<8x9xf32> to vector<8x1xf32>
    %208 = vector.shape_cast %207 : vector<8x1xf32> to vector<8x1xf32>
    %209 = vector.broadcast %208 : vector<8x1xf32> to vector<8x8xf32>
    %210 = arith.select %206, %209, %204 : vector<8x8xi1>, vector<8x8xf32>
    %c5_i32_41 = arith.constant 5 : i32
    %211 = vector.broadcast %c5_i32_41 : i32 to vector<8x8xi32>
    %212 = arith.cmpi eq, %14, %211 : vector<8x8xi32>
    %213 = vector.extract_strided_slice %178 {offsets = [0, 5], sizes = [8, 1], strides = [1, 1]} : vector<8x9xf32> to vector<8x1xf32>
    %214 = vector.shape_cast %213 : vector<8x1xf32> to vector<8x1xf32>
    %215 = vector.broadcast %214 : vector<8x1xf32> to vector<8x8xf32>
    %216 = arith.select %212, %215, %210 : vector<8x8xi1>, vector<8x8xf32>
    %c6_i32_42 = arith.constant 6 : i32
    %217 = vector.broadcast %c6_i32_42 : i32 to vector<8x8xi32>
    %218 = arith.cmpi eq, %14, %217 : vector<8x8xi32>
    %219 = vector.extract_strided_slice %178 {offsets = [0, 6], sizes = [8, 1], strides = [1, 1]} : vector<8x9xf32> to vector<8x1xf32>
    %220 = vector.shape_cast %219 : vector<8x1xf32> to vector<8x1xf32>
    %221 = vector.broadcast %220 : vector<8x1xf32> to vector<8x8xf32>
    %222 = arith.select %218, %221, %216 : vector<8x8xi1>, vector<8x8xf32>
    %c7_i32_43 = arith.constant 7 : i32
    %223 = vector.broadcast %c7_i32_43 : i32 to vector<8x8xi32>
    %224 = arith.cmpi eq, %14, %223 : vector<8x8xi32>
    %225 = vector.extract_strided_slice %178 {offsets = [0, 7], sizes = [8, 1], strides = [1, 1]} : vector<8x9xf32> to vector<8x1xf32>
    %226 = vector.shape_cast %225 : vector<8x1xf32> to vector<8x1xf32>
    %227 = vector.broadcast %226 : vector<8x1xf32> to vector<8x8xf32>
    %228 = arith.select %224, %227, %222 : vector<8x8xi1>, vector<8x8xf32>
    %c8_i32_44 = arith.constant 8 : i32
    %229 = vector.broadcast %c8_i32_44 : i32 to vector<8x8xi32>
    %230 = arith.cmpi eq, %14, %229 : vector<8x8xi32>
    %231 = vector.extract_strided_slice %178 {offsets = [0, 8], sizes = [8, 1], strides = [1, 1]} : vector<8x9xf32> to vector<8x1xf32>
    %232 = vector.shape_cast %231 : vector<8x1xf32> to vector<8x1xf32>
    %233 = vector.broadcast %232 : vector<8x1xf32> to vector<8x8xf32>
    %234 = arith.select %230, %233, %228 : vector<8x8xi1>, vector<8x8xf32>
    %235 = arith.addf %179, %234 : vector<8x8xf32>
    %cst_45 = arith.constant -9.99999984E+17 : f32
    %236 = vector.broadcast %cst_45 : f32 to vector<8x8xf32>
    %237 = arith.select %175, %235, %236 : vector<8x8xi1>, vector<8x8xf32>
    %cst_46 = arith.constant dense<0xFF800000> : vector<8xf32>
    %238 = vector.multi_reduction <maximumf>, %237, %cst_46 [1] : vector<8x8xf32> to vector<8xf32>
    %239 = vector.shape_cast %238 : vector<8xf32> to vector<8x1xf32>
    %240 = vector.broadcast %239 : vector<8x1xf32> to vector<8x8xf32>
    %241 = arith.subf %237, %240 : vector<8x8xf32>
    %242 = math.exp %241 : vector<8x8xf32>
    %cst_47 = arith.constant dense<0.000000e+00> : vector<8xf32>
    %243 = vector.multi_reduction <add>, %242, %cst_47 [1] : vector<8x8xf32> to vector<8xf32>
    %244 = vector.shape_cast %243 : vector<8xf32> to vector<8x1xf32>
    %245 = tpu.reciprocal %244 {approx = true} : vector<8x1xf32> -> vector<8x1xf32>
    %246 = arith.mulf %244, %245 : vector<8x1xf32>
    %cst_48 = arith.constant 2.000000e+00 : f32
    %247 = vector.broadcast %cst_48 : f32 to vector<8x1xf32>
    %248 = arith.subf %247, %246 : vector<8x1xf32>
    %249 = arith.mulf %245, %248 : vector<8x1xf32>
    %250 = vector.broadcast %249 : vector<8x1xf32> to vector<8x8xf32>
    %251 = arith.mulf %242, %250 : vector<8x8xf32>
    %c8 = arith.constant 8 : index
    %c0_49 = arith.constant 0 : index
    %252 = vector.load %arg5[%c8, %c0_49] : memref<16x8xf32, #tpu.memory_space<vmem>>, vector<8x8xf32>
    tpu.vector_store %arg5[%c8, %c0_49], %251 {strides = array<i32>} : memref<16x8xf32, #tpu.memory_space<vmem>>, vector<8x8xf32>,
    %253 = vector.extract_strided_slice %174 {offsets = [0, 64], sizes = [8, 32], strides = [1, 1]} : vector<8x146xf32> to vector<8x32xf32>
    %254 = vector.extract_strided_slice %174 {offsets = [0, 96], sizes = [8, 32], strides = [1, 1]} : vector<8x146xf32> to vector<8x32xf32>
    %255 = vector.extract_strided_slice %174 {offsets = [0, 137], sizes = [8, 9], strides = [1, 1]} : vector<8x146xf32> to vector<8x9xf32>
    %cst_50 = arith.constant dense<0.000000e+00> : vector<8x8xf32>
    %256 = tpu.matmul %253, %254, %cst_50 {dimension_numbers = #tpu.dot_dimension_numbers<[1], [1], [0], [0], [0, 0, 1, 0], [], []>} : vector<8x32xf32>, vector<8x32xf32>, vector<8x8xf32> -> vector<8x8xf32>
    %cst_51 = arith.constant 0.000000e+00 : f32
    %257 = vector.broadcast %cst_51 : f32 to vector<8x8xf32>
    %c0_i32_52 = arith.constant 0 : i32
    %258 = vector.broadcast %c0_i32_52 : i32 to vector<8x8xi32>
    %259 = arith.cmpi eq, %14, %258 : vector<8x8xi32>
    %260 = vector.extract_strided_slice %255 {offsets = [0, 0], sizes = [8, 1], strides = [1, 1]} : vector<8x9xf32> to vector<8x1xf32>
    %261 = vector.shape_cast %260 : vector<8x1xf32> to vector<8x1xf32>
    %262 = vector.broadcast %261 : vector<8x1xf32> to vector<8x8xf32>
    %263 = arith.select %259, %262, %257 : vector<8x8xi1>, vector<8x8xf32>
    %c1_i32_53 = arith.constant 1 : i32
    %264 = vector.broadcast %c1_i32_53 : i32 to vector<8x8xi32>
    %265 = arith.cmpi eq, %14, %264 : vector<8x8xi32>
    %266 = vector.extract_strided_slice %255 {offsets = [0, 1], sizes = [8, 1], strides = [1, 1]} : vector<8x9xf32> to vector<8x1xf32>
    %267 = vector.shape_cast %266 : vector<8x1xf32> to vector<8x1xf32>
    %268 = vector.broadcast %267 : vector<8x1xf32> to vector<8x8xf32>
    %269 = arith.select %265, %268, %263 : vector<8x8xi1>, vector<8x8xf32>
    %c2_i32_54 = arith.constant 2 : i32
    %270 = vector.broadcast %c2_i32_54 : i32 to vector<8x8xi32>
    %271 = arith.cmpi eq, %14, %270 : vector<8x8xi32>
    %272 = vector.extract_strided_slice %255 {offsets = [0, 2], sizes = [8, 1], strides = [1, 1]} : vector<8x9xf32> to vector<8x1xf32>
    %273 = vector.shape_cast %272 : vector<8x1xf32> to vector<8x1xf32>
    %274 = vector.broadcast %273 : vector<8x1xf32> to vector<8x8xf32>
    %275 = arith.select %271, %274, %269 : vector<8x8xi1>, vector<8x8xf32>
    %c3_i32_55 = arith.constant 3 : i32
    %276 = vector.broadcast %c3_i32_55 : i32 to vector<8x8xi32>
    %277 = arith.cmpi eq, %14, %276 : vector<8x8xi32>
    %278 = vector.extract_strided_slice %255 {offsets = [0, 3], sizes = [8, 1], strides = [1, 1]} : vector<8x9xf32> to vector<8x1xf32>
    %279 = vector.shape_cast %278 : vector<8x1xf32> to vector<8x1xf32>
    %280 = vector.broadcast %279 : vector<8x1xf32> to vector<8x8xf32>
    %281 = arith.select %277, %280, %275 : vector<8x8xi1>, vector<8x8xf32>
    %c4_i32_56 = arith.constant 4 : i32
    %282 = vector.broadcast %c4_i32_56 : i32 to vector<8x8xi32>
    %283 = arith.cmpi eq, %14, %282 : vector<8x8xi32>
    %284 = vector.extract_strided_slice %255 {offsets = [0, 4], sizes = [8, 1], strides = [1, 1]} : vector<8x9xf32> to vector<8x1xf32>
    %285 = vector.shape_cast %284 : vector<8x1xf32> to vector<8x1xf32>
    %286 = vector.broadcast %285 : vector<8x1xf32> to vector<8x8xf32>
    %287 = arith.select %283, %286, %281 : vector<8x8xi1>, vector<8x8xf32>
    %c5_i32_57 = arith.constant 5 : i32
    %288 = vector.broadcast %c5_i32_57 : i32 to vector<8x8xi32>
    %289 = arith.cmpi eq, %14, %288 : vector<8x8xi32>
    %290 = vector.extract_strided_slice %255 {offsets = [0, 5], sizes = [8, 1], strides = [1, 1]} : vector<8x9xf32> to vector<8x1xf32>
    %291 = vector.shape_cast %290 : vector<8x1xf32> to vector<8x1xf32>
    %292 = vector.broadcast %291 : vector<8x1xf32> to vector<8x8xf32>
    %293 = arith.select %289, %292, %287 : vector<8x8xi1>, vector<8x8xf32>
    %c6_i32_58 = arith.constant 6 : i32
    %294 = vector.broadcast %c6_i32_58 : i32 to vector<8x8xi32>
    %295 = arith.cmpi eq, %14, %294 : vector<8x8xi32>
    %296 = vector.extract_strided_slice %255 {offsets = [0, 6], sizes = [8, 1], strides = [1, 1]} : vector<8x9xf32> to vector<8x1xf32>
    %297 = vector.shape_cast %296 : vector<8x1xf32> to vector<8x1xf32>
    %298 = vector.broadcast %297 : vector<8x1xf32> to vector<8x8xf32>
    %299 = arith.select %295, %298, %293 : vector<8x8xi1>, vector<8x8xf32>
    %c7_i32_59 = arith.constant 7 : i32
    %300 = vector.broadcast %c7_i32_59 : i32 to vector<8x8xi32>
    %301 = arith.cmpi eq, %14, %300 : vector<8x8xi32>
    %302 = vector.extract_strided_slice %255 {offsets = [0, 7], sizes = [8, 1], strides = [1, 1]} : vector<8x9xf32> to vector<8x1xf32>
    %303 = vector.shape_cast %302 : vector<8x1xf32> to vector<8x1xf32>
    %304 = vector.broadcast %303 : vector<8x1xf32> to vector<8x8xf32>
    %305 = arith.select %301, %304, %299 : vector<8x8xi1>, vector<8x8xf32>
    %c8_i32_60 = arith.constant 8 : i32
    %306 = vector.broadcast %c8_i32_60 : i32 to vector<8x8xi32>
    %307 = arith.cmpi eq, %14, %306 : vector<8x8xi32>
    %308 = vector.extract_strided_slice %255 {offsets = [0, 8], sizes = [8, 1], strides = [1, 1]} : vector<8x9xf32> to vector<8x1xf32>
    %309 = vector.shape_cast %308 : vector<8x1xf32> to vector<8x1xf32>
    %310 = vector.broadcast %309 : vector<8x1xf32> to vector<8x8xf32>
    %311 = arith.select %307, %310, %305 : vector<8x8xi1>, vector<8x8xf32>
    %312 = arith.addf %256, %311 : vector<8x8xf32>
    %cst_61 = arith.constant -9.99999984E+17 : f32
    %313 = vector.broadcast %cst_61 : f32 to vector<8x8xf32>
    %314 = arith.select %175, %312, %313 : vector<8x8xi1>, vector<8x8xf32>
    %cst_62 = arith.constant dense<0xFF800000> : vector<8xf32>
    %315 = vector.multi_reduction <maximumf>, %314, %cst_62 [1] : vector<8x8xf32> to vector<8xf32>
    %316 = vector.shape_cast %315 : vector<8xf32> to vector<8x1xf32>
    %317 = vector.broadcast %316 : vector<8x1xf32> to vector<8x8xf32>
    %318 = arith.subf %314, %317 : vector<8x8xf32>
    %319 = math.exp %318 : vector<8x8xf32>
    %cst_63 = arith.constant dense<0.000000e+00> : vector<8xf32>
    %320 = vector.multi_reduction <add>, %319, %cst_63 [1] : vector<8x8xf32> to vector<8xf32>
    %321 = vector.shape_cast %320 : vector<8xf32> to vector<8x1xf32>
    %322 = tpu.reciprocal %321 {approx = true} : vector<8x1xf32> -> vector<8x1xf32>
    %323 = arith.mulf %321, %322 : vector<8x1xf32>
    %cst_64 = arith.constant 2.000000e+00 : f32
    %324 = vector.broadcast %cst_64 : f32 to vector<8x1xf32>
    %325 = arith.subf %324, %323 : vector<8x1xf32>
    %326 = arith.mulf %322, %325 : vector<8x1xf32>
    %327 = vector.broadcast %326 : vector<8x1xf32> to vector<8x8xf32>
    %328 = arith.mulf %319, %327 : vector<8x8xf32>
    %c8_65 = arith.constant 8 : index
    %c0_66 = arith.constant 0 : index
    %329 = vector.load %arg6[%c8_65, %c0_66] : memref<16x8xf32, #tpu.memory_space<vmem>>, vector<8x8xf32>
    tpu.vector_store %arg6[%c8_65, %c0_66], %328 {strides = array<i32>} : memref<16x8xf32, #tpu.memory_space<vmem>>, vector<8x8xf32>,
    return
  }
  func.func @transform_0(%arg0: i32) -> (i32, i32) {
    %c0_i32 = arith.constant 0 : i32
    %c0_i32_0 = arith.constant 0 : i32
    return %arg0, %c0_i32 : i32, i32
  }
  func.func @transform_1(%arg0: i32) -> (i32, i32) {
    %c0_i32 = arith.constant 0 : i32
    %c0_i32_0 = arith.constant 0 : i32
    return %arg0, %c0_i32 : i32, i32
  }
  func.func @transform_2(%arg0: i32) -> (i32, i32) {
    %c0_i32 = arith.constant 0 : i32
    %c0_i32_0 = arith.constant 0 : i32
    %c0_i32_1 = arith.constant 0 : i32
    return %c0_i32, %c0_i32_0 : i32, i32
  }
  func.func @transform_3(%arg0: i32) -> (i32, i32) {
    %c0_i32 = arith.constant 0 : i32
    %c0_i32_0 = arith.constant 0 : i32
    %c0_i32_1 = arith.constant 0 : i32
    return %c0_i32, %c0_i32_0 : i32, i32
  }
  func.func @transform_4(%arg0: i32) -> (i32, i32) {
    %c0_i32 = arith.constant 0 : i32
    %c0_i32_0 = arith.constant 0 : i32
    return %arg0, %c0_i32 : i32, i32
  }
  func.func @transform_5(%arg0: i32) -> (i32, i32) {
    %c0_i32 = arith.constant 0 : i32
    %c0_i32_0 = arith.constant 0 : i32
    return %arg0, %c0_i32 : i32, i32
  }
}

</mosaic_0001>

<llo_original>
// kernel: tpu_custom_call.1
$region0: #{tpu_custom_call.1}
  #allocation0 [shape = 'u32[]', space=smem, size = 0x4, offset = 0x4, fixed_abs, tag = 'smem constant byte address 0x4 - core index']
  #allocation1 [shape = 'u32[144,128]{1,0:T(1,128)}', space=vmem, size = 0x12000, scoped, tag = 'internal scratch']
  %s0 = inlined_call_operand.hbm [shape: f32[16,32], index: 0, kind: input, shape index: {}]
  %s1 = inlined_call_operand.vmem [shape: s8[16,8], index: 1, kind: input, shape index: {}]
  %s2 = inlined_call_operand.hbm [shape: f32[32,146], index: 2, kind: input, shape index: {}]
  %s3 = inlined_call_operand.vmem [shape: f32[1,146], index: 3, kind: input, shape index: {}]
  %s4 = inlined_call_operand.vmem [shape: f32[16,8], index: 4, kind: output, shape index: {0}]
  %s5 = inlined_call_operand.vmem [shape: f32[16,8], index: 5, kind: output, shape index: {1}]
  %6 = xla_tuple %s4, %s5
  %s7 = sld [smem:[#allocation0]]
  $region42: #{tpu_custom_call.1} parent=0
    _
  %s9 = ssub.s32 1, %s7
  %s10 = scalar_select 0, %s9, %s7
  $region1: #{tpu_custom_call.1} parent=0
    #allocation2 [shape = 'u8[8192]{0}', space=vmem, size = 0x2000, scoped, tag = 'input window, operand 0, single buffered']
    #allocation3 [shape = 's32[1]{0}', space=sflag, size = 0x4, scoped, tag = 'scoped memory for tpu_custom_call.1']
    #allocation4 [shape = 'u8[32768]{0}', space=vmem, size = 0x8000, scoped, tag = 'input window, operand 2, single buffered']
    #allocation5 [shape = 's32[1]{0}', space=sflag, size = 0x4, scoped, tag = 'scoped memory for tpu_custom_call.1']
    %11 = vsyncpa [#allocation3], 0
    %12 = vsyncpa [#allocation5], 0
    // Predicated region
    $region2: #{tpu_custom_call.1} parent=1 // pred_check
      _
    $region3: #{tpu_custom_call.1} parent=1 // pred_check_branch
      %14 = sbr.rel (0) target = $region5
    $region4: #{tpu_custom_call.1} parent=1 // pred_region
      %s16 = ssub.s32 256, 256
      %17 = vsyncadd [#allocation3], %s16
      %s18 = sshll.u32 [#allocation2], 4
      %s19 = int_to_ptr.vmem [resolvable:$true] %s18
      %24 = dma.hbm_to_vmem [thread:$0]  %s0, 256, %s19, [#allocation3], 128, 128, 8
    $region5: #{tpu_custom_call.1} parent=1 // pred_fallthru
      _
    // Predicated region
    $region6: #{tpu_custom_call.1} parent=1 // pred_check
      _
    $region7: #{tpu_custom_call.1} parent=1 // pred_check_branch
      %26 = sbr.rel (0) target = $region9
    $region8: #{tpu_custom_call.1} parent=1 // pred_region
      _
    $region9: #{tpu_custom_call.1} parent=1 // pred_fallthru
      _
    // Predicated region
    $region10: #{tpu_custom_call.1} parent=1 // pred_check
      _
    $region11: #{tpu_custom_call.1} parent=1 // pred_check_branch
      %28 = sbr.rel (0) target = $region13
    $region12: #{tpu_custom_call.1} parent=1 // pred_region
      %s30 = ssub.s32 1024, 1024
      %31 = vsyncadd [#allocation5], %s30
      %s32 = sshll.u32 [#allocation4], 4
      %s33 = int_to_ptr.vmem [resolvable:$true] %s32
      %38 = dma.hbm_to_vmem [thread:$0]  %s2, 1024, %s33, [#allocation5], 256, 256, 16
    $region13: #{tpu_custom_call.1} parent=1 // pred_fallthru
      _
    // Predicated region
    $region14: #{tpu_custom_call.1} parent=1 // pred_check
      _
    $region15: #{tpu_custom_call.1} parent=1 // pred_check_branch
      %40 = sbr.rel (0) target = $region17
    $region16: #{tpu_custom_call.1} parent=1 // pred_region
      _
    $region17: #{tpu_custom_call.1} parent=1 // pred_fallthru
      _
    // Predicated region
    $region18: #{tpu_custom_call.1} parent=1 // pred_check
      _
    $region19: #{tpu_custom_call.1} parent=1 // pred_check_branch
      %42 = sbr.rel (0) target = $region21
    $region20: #{tpu_custom_call.1} parent=1 // pred_region
      %43 = dma.done [#allocation3], 256
    $region21: #{tpu_custom_call.1} parent=1 // pred_fallthru
      _
    // Predicated region
    $region22: #{tpu_custom_call.1} parent=1 // pred_check
      _
    $region23: #{tpu_custom_call.1} parent=1 // pred_check_branch
      %45 = sbr.rel (0) target = $region25
    $region24: #{tpu_custom_call.1} parent=1 // pred_region
      %46 = dma.done [#allocation5], 1024
    $region25: #{tpu_custom_call.1} parent=1 // pred_fallthru
      _
    %v49 = vld [vmem:[#allocation2] sm:$0xff]
    %v50 = vld [vmem:[#allocation2 + $0x8] sm:$0xff]
    %v51 = vld [vmem:[#allocation4] sm:$0xff]
    %v52 = vld [vmem:[#allocation4 + $0x8] sm:$0xff]
    %v53 = vld [vmem:[#allocation4 + $0x10] sm:$0xff]
    %v54 = vld [vmem:[#allocation4 + $0x18] sm:$0xff]
    %v55 = vld [vmem:[#allocation4 + $0x20] sm:$0xff]
    %v56 = vld [vmem:[#allocation4 + $0x28] sm:$0xff]
    %v57 = vld [vmem:[#allocation4 + $0x30] sm:$0xff]
    %v58 = vld [vmem:[#allocation4 + $0x38] sm:$0xff]
    %v59 = vld [vmem:[%s3] sm:$0x3]
    %v60 = vld [vmem:[%s1] sm:$0x3]
    %v61 = vld [vmem:[%s1 + $0x2] sm:$0x3]
    %vm62 = vnez %v60
    %vm63 = vnez %v61
    %v64 = vlaneseq
    %v65 = vshrl.u32 %v64, 7
    %v66 = vlaneseq
    %v67 = vand.u32 %v66, 127
    %v68 = vsub.s32 %v67, %v65
    %vm69 = vcmp.gt.s32.totalorder %v68, 4294967292
    %v70 = vsel %vm69, %v68, 4294967292
    %vm71 = vcmp.lt.s32.totalorder %v70, 4
    %v72 = vsel %vm71, %v70, 4
    %v73 = vadd.s32 %v72, 4
    %v75 = vlaneseq
    %v76 = vshrl.u32 %v75, 7
    %v77 = vsub.s32 0, %v76
    %v78 = vrot.slane %v59, %v77
    %v79 = vlaneseq
    %v80 = vshrl.u32 %v79, 7
    %v81 = vsub.s32 1, %v80
    %v82 = vrot.slane %v59, %v81
    %vm85 = vcmask 261120
    %v87 = vsel %vm85, %v49, 0
    %v90 = vsel %vm85, %v50, 0
    %92 = vmatprep.subr.mxu0 %v52
    %93 = vmatpush1.msra.mxu0 %v51
    %94 = vmatprep.subr.mxu0 %v54
    %95 = vmatpush1.msra.mxu0 %v53
    %96 = vmatprep.subr.mxu0 %v56
    %97 = vmatpush1.msra.mxu0 %v55
    %98 = vmatprep.subr.mxu0 %v58
    %99 = vmatpush1.msra.mxu0 %v57
    %100 = vmatprep.subr.mxu0 0.0
    %101 = vmatpush1.msra.mxu0 0.0
    %102 = vmatprep.subr.mxu0 0.0
    %103 = vmatpush1.msra.mxu0 0.0
    %104 = vmatprep.subr.mxu0 0.0
    %105 = vmatpush1.msra.mxu0 0.0
    %106 = vmatprep.subr.mxu0 0.0
    %107 = vmatpush1.msra.mxu0 0.0
    %108 = vmatprep.subr.mxu0 0.0
    %109 = vmatpush1.msra.mxu0 0.0
    %110 = vmatprep.subr.mxu0 0.0
    %111 = vmatpush1.msra.mxu0 0.0
    %112 = vmatprep.subr.mxu0 0.0
    %113 = vmatpush1.msra.mxu0 0.0
    %114 = vmatprep.subr.mxu0 0.0
    %115 = vmatpush1.msra.mxu0 0.0
    %116 = vmatprep.subr.mxu0 0.0
    %117 = vmatpush1.msra.mxu0 0.0
    %118 = vmatprep.subr.mxu0 0.0
    %119 = vmatpush1.msra.mxu0 0.0
    %120 = vmatprep.subr.mxu0 0.0
    %121 = vmatpush1.msra.mxu0 0.0
    %122 = vmatprep.subr.mxu0 0.0
    %123 = vmatpush1.msra.mxu0 0.0
    %124 = vmatprep.subr.mxu0 0.0
    %125 = vmatpush1.msra.mxu0 0.0
    %126 = vmatprep.subr.mxu0 0.0
    %127 = vmatpush1.msra.mxu0 0.0
    %128 = vmatprep.subr.mxu0 0.0
    %129 = vmatpush1.msra.mxu0 0.0
    %130 = vmatprep.subr.mxu0 0.0
    %131 = vmatpush1.msra.mxu0 0.0
    %132 = vmatprep.subr.mxu0 0.0
    %133 = vmatpush1.msra.mxu0 0.0
    %134 = vmatprep.subr.mxu0 0.0
    %135 = vmatpush1.msra.mxu0 0.0
    %136 = vmatprep.subr.mxu0 0.0
    %137 = vmatpush1.msra.mxu0 0.0
    %138 = vmatprep.subr.mxu0 0.0
    %139 = vmatpush1.msra.mxu0 0.0
    %140 = vmatprep.subr.mxu0 0.0
    %141 = vmatpush1.msra.mxu0 0.0
    %142 = vmatprep.subr.mxu0 0.0
    %143 = vmatpush1.msra.mxu0 0.0
    %144 = vmatprep.subr.mxu0 0.0
    %145 = vmatpush1.msra.mxu0 0.0
    %146 = vmatprep.subr.mxu0 0.0
    %147 = vmatpush1.msra.mxu0 0.0
    %148 = vmatprep.subr.mxu0 0.0
    %149 = vmatpush1.msra.mxu0 0.0
    %150 = vmatprep.subr.mxu0 0.0
    %151 = vmatpush1.msra.mxu0 0.0
    %152 = vmatprep.subr.mxu0 0.0
    %153 = vmatpush1.msra.mxu0 0.0
    %154 = vmatprep.subr.mxu0 0.0
    %155 = vmatpush1.msra.mxu0 0.0
    %156 = vmatprep.mubr.f32.mxu0 0.0
    %157 = vmatmul.mubr.f32.gmra.mrb[0].mxu0 %v87
    %v158 = vpop.f32.mrb[0].mxu0
    %v159 = vadd.f32 %v78, %v158
    %v160 = vpop.f32.mrb[0].mxu0
    %v161 = vadd.f32 %v82, %v160
    %162 = vmatprep.mubr.f32.mxu0 0.0
    %163 = vmatmul.mubr.f32.gmra.mrb[0].mxu0 %v90
    %v164 = vpop.f32.mrb[0].mxu0
    %v165 = vadd.f32 %v78, %v164
    %v166 = vpop.f32.mrb[0].mxu0
    %v167 = vadd.f32 %v82, %v166
    %168 = vdwg.mxu0
    %vm169 = vcmp.eq.s32.totalorder %v73, 0
    %171 = vset.pattern.permute.xlu0 0
    %172 = vperm.xlu0 %171, %v161
    %v173 = vpop.permute.xlu0 %172
    %v175 = vsel %vm169, %v173, 0.0
    %vm176 = vcmp.eq.s32.totalorder %v73, 1
    %177 = vset.pattern.permute.xlu0 1
    %178 = vperm.xlu0 %177, %v161
    %v179 = vpop.permute.xlu0 %178
    %v181 = vsel %vm176, %v179, %v175
    %vm182 = vcmp.eq.s32.totalorder %v73, 2
    %183 = vset.pattern.permute.xlu0 2
    %184 = vperm.xlu0 %183, %v161
    %v185 = vpop.permute.xlu0 %184
    %v187 = vsel %vm182, %v185, %v181
    %vm188 = vcmp.eq.s32.totalorder %v73, 3
    %189 = vset.pattern.permute.xlu0 3
    %190 = vperm.xlu0 %189, %v161
    %v191 = vpop.permute.xlu0 %190
    %v193 = vsel %vm188, %v191, %v187
    %vm194 = vcmp.eq.s32.totalorder %v73, 4
    %195 = vset.pattern.permute.xlu0 4
    %196 = vperm.xlu0 %195, %v161
    %v197 = vpop.permute.xlu0 %196
    %v199 = vsel %vm194, %v197, %v193
    %vm200 = vcmp.eq.s32.totalorder %v73, 5
    %201 = vset.pattern.permute.xlu0 5
    %202 = vperm.xlu0 %201, %v161
    %v203 = vpop.permute.xlu0 %202
    %v205 = vsel %vm200, %v203, %v199
    %vm206 = vcmp.eq.s32.totalorder %v73, 6
    %207 = vset.pattern.permute.xlu0 6
    %208 = vperm.xlu0 %207, %v161
    %v209 = vpop.permute.xlu0 %208
    %v211 = vsel %vm206, %v209, %v205
    %vm212 = vcmp.eq.s32.totalorder %v73, 7
    %213 = vset.pattern.permute.xlu0 7
    %214 = vperm.xlu0 %213, %v161
    %v215 = vpop.permute.xlu0 %214
    %v217 = vsel %vm212, %v215, %v211
    %vm218 = vcmp.eq.s32.totalorder %v73, 8
    %219 = vset.pattern.permute.xlu0 8
    %220 = vperm.xlu0 %219, %v161
    %v221 = vpop.permute.xlu0 %220
    %v223 = vsel %vm218, %v221, %v217
    %225 = vrot.lane.b32.xlu0 %v159, 96
    %v226 = vpop.permute.xlu0 %225
    %v227 = vsel %vm85, %v159, 0
    %v229 = vsel %vm85, %v226, 0
    %231 = vmatprep.subr.mxu0 0.0
    %232 = vmatpush1.xpose.msra.mxu0 %v229
    %233 = vmatprep.subr.mxu0 0.0
    %234 = vmatpush1.xpose.msra.mxu0 0.0
    %235 = vmatprep.subr.mxu0 0.0
    %236 = vmatpush1.xpose.msra.mxu0 0.0
    %237 = vmatprep.subr.mxu0 0.0
    %238 = vmatpush1.xpose.msra.mxu0 0.0
    %239 = vmatprep.subr.mxu0 0.0
    %240 = vmatpush1.xpose.msra.mxu0 0.0
    %241 = vmatprep.subr.mxu0 0.0
    %242 = vmatpush1.xpose.msra.mxu0 0.0
    %243 = vmatprep.subr.mxu0 0.0
    %244 = vmatpush1.xpose.msra.mxu0 0.0
    %245 = vmatprep.subr.mxu0 0.0
    %246 = vmatpush1.xpose.msra.mxu0 0.0
    %247 = vmatprep.subr.mxu0 0.0
    %248 = vmatpush1.xpose.msra.mxu0 0.0
    %249 = vmatprep.subr.mxu0 0.0
    %250 = vmatpush1.xpose.msra.mxu0 0.0
    %251 = vmatprep.subr.mxu0 0.0
    %252 = vmatpush1.xpose.msra.mxu0 0.0
    %253 = vmatprep.subr.mxu0 0.0
    %254 = vmatpush1.xpose.msra.mxu0 0.0
    %255 = vmatprep.subr.mxu0 0.0
    %256 = vmatpush1.xpose.msra.mxu0 0.0
    %257 = vmatprep.subr.mxu0 0.0
    %258 = vmatpush1.xpose.msra.mxu0 0.0
    %259 = vmatprep.subr.mxu0 0.0
    %260 = vmatpush1.xpose.msra.mxu0 0.0
    %261 = vmatprep.subr.mxu0 0.0
    %262 = vmatpush1.xpose.msra.mxu0 0.0
    %263 = vmatprep.subr.mxu0 0.0
    %264 = vmatpush1.xpose.msra.mxu0 0.0
    %265 = vmatprep.subr.mxu0 0.0
    %266 = vmatpush1.xpose.msra.mxu0 0.0
    %267 = vmatprep.subr.mxu0 0.0
    %268 = vmatpush1.xpose.msra.mxu0 0.0
    %269 = vmatprep.subr.mxu0 0.0
    %270 = vmatpush1.xpose.msra.mxu0 0.0
    %271 = vmatprep.subr.mxu0 0.0
    %272 = vmatpush1.xpose.msra.mxu0 0.0
    %273 = vmatprep.subr.mxu0 0.0
    %274 = vmatpush1.xpose.msra.mxu0 0.0
    %275 = vmatprep.subr.mxu0 0.0
    %276 = vmatpush1.xpose.msra.mxu0 0.0
    %277 = vmatprep.subr.mxu0 0.0
    %278 = vmatpush1.xpose.msra.mxu0 0.0
    %279 = vmatprep.subr.mxu0 0.0
    %280 = vmatpush1.xpose.msra.mxu0 0.0
    %281 = vmatprep.subr.mxu0 0.0
    %282 = vmatpush1.xpose.msra.mxu0 0.0
    %283 = vmatprep.subr.mxu0 0.0
    %284 = vmatpush1.xpose.msra.mxu0 0.0
    %285 = vmatprep.subr.mxu0 0.0
    %286 = vmatpush1.xpose.msra.mxu0 0.0
    %287 = vmatprep.subr.mxu0 0.0
    %288 = vmatpush1.xpose.msra.mxu0 0.0
    %289 = vmatprep.subr.mxu0 0.0
    %290 = vmatpush1.xpose.msra.mxu0 0.0
    %291 = vmatprep.subr.mxu0 0.0
    %292 = vmatpush1.xpose.msra.mxu0 0.0
    %293 = vmatprep.subr.mxu0 0.0
    %294 = vmatpush1.xpose.msra.mxu0 0.0
    %295 = vmatprep.mubr.f32.mxu0 0.0
    %296 = vmatmul.mubr.f32.gmra.mrb[0].mxu0 %v227
    %v297 = vpop.f32.mrb[0].mxu0
    %v298 = vadd.f32 %v223, %v297
    %v299 = vpop.f32.mrb[0].mxu0
    %300 = vdwg.mxu0
    %v301 = vsel %vm62, 16843009, 0
    %v302 = vunpack.c.0.s8 %v301
    %vm303 = vcmp.ne.s32.totalorder %v302, 0
    %v304 = vsel %vm303, %v298, -1e+18
    %vm305 = vcmask 64512
    %v306 = vsel %vm305, %v304, -inf
    %307 = vmax.xlane.f32.xlu0 %v306
    %v308 = vpop.xlane.xlu0 %307
    %v309 = vsub.f32 %v304, %v308
    %v310 = vmul.f32 %v309, 1.442695
    %v311 = vpow.pop %v310
    %v312 = vsel %vm305, %v311, 0.0
    %313 = vadd.xlane.f32.xlu0 %v312
    %v314 = vpop.xlane.xlu0 %313
    %v315 = vrcp.pop %v314
    %v316 = vmul.f32 %v314, %v315
    %v317 = vsub.f32 2.0, %v316
    %v318 = vmul.f32 %v315, %v317
    %v319 = vmul.f32 %v311, %v318
    %320 = vst.msk [vmem:[%s4] sm:$0xff] %vm305, %v319
    %321 = vset.pattern.permute.xlu0 9
    %322 = vperm.xlu0 %321, %v161
    %v323 = vpop.permute.xlu0 %322
    %v325 = vsel %vm169, %v323, 0.0
    %326 = vset.pattern.permute.xlu0 10
    %327 = vperm.xlu0 %326, %v161
    %v328 = vpop.permute.xlu0 %327
    %v330 = vsel %vm176, %v328, %v325
    %331 = vset.pattern.permute.xlu0 11
    %332 = vperm.xlu0 %331, %v161
    %v333 = vpop.permute.xlu0 %332
    %v335 = vsel %vm182, %v333, %v330
    %336 = vset.pattern.permute.xlu0 12
    %337 = vperm.xlu0 %336, %v161
    %v338 = vpop.permute.xlu0 %337
    %v340 = vsel %vm188, %v338, %v335
    %341 = vset.pattern.permute.xlu0 13
    %342 = vperm.xlu0 %341, %v161
    %v343 = vpop.permute.xlu0 %342
    %v345 = vsel %vm194, %v343, %v340
    %346 = vset.pattern.permute.xlu0 14
    %347 = vperm.xlu0 %346, %v161
    %v348 = vpop.permute.xlu0 %347
    %v350 = vsel %vm200, %v348, %v345
    %351 = vset.pattern.permute.xlu0 15
    %352 = vperm.xlu0 %351, %v161
    %v353 = vpop.permute.xlu0 %352
    %v355 = vsel %vm206, %v353, %v350
    %356 = vset.pattern.permute.xlu0 16
    %357 = vperm.xlu0 %356, %v161
    %v358 = vpop.permute.xlu0 %357
    %v360 = vsel %vm212, %v358, %v355
    %361 = vset.pattern.permute.xlu0 17
    %362 = vperm.xlu0 %361, %v161
    %v363 = vpop.permute.xlu0 %362
    %v365 = vsel %vm218, %v363, %v360
    %366 = vrot.lane.b32.xlu0 %v159, 64
    %v367 = vpop.permute.xlu0 %366
    %368 = vrot.lane.b32.xlu0 %v159, 32
    %v369 = vpop.permute.xlu0 %368
    %v370 = vsel %vm85, %v367, 0
    %v372 = vsel %vm85, %v369, 0
    %374 = vmatprep.subr.mxu0 0.0
    %375 = vmatpush1.xpose.msra.mxu0 %v372
    %376 = vmatprep.subr.mxu0 0.0
    %377 = vmatpush1.xpose.msra.mxu0 0.0
    %378 = vmatprep.subr.mxu0 0.0
    %379 = vmatpush1.xpose.msra.mxu0 0.0
    %380 = vmatprep.subr.mxu0 0.0
    %381 = vmatpush1.xpose.msra.mxu0 0.0
    %382 = vmatprep.subr.mxu0 0.0
    %383 = vmatpush1.xpose.msra.mxu0 0.0
    %384 = vmatprep.subr.mxu0 0.0
    %385 = vmatpush1.xpose.msra.mxu0 0.0
    %386 = vmatprep.subr.mxu0 0.0
    %387 = vmatpush1.xpose.msra.mxu0 0.0
    %388 = vmatprep.subr.mxu0 0.0
    %389 = vmatpush1.xpose.msra.mxu0 0.0
    %390 = vmatprep.subr.mxu0 0.0
    %391 = vmatpush1.xpose.msra.mxu0 0.0
    %392 = vmatprep.subr.mxu0 0.0
    %393 = vmatpush1.xpose.msra.mxu0 0.0
    %394 = vmatprep.subr.mxu0 0.0
    %395 = vmatpush1.xpose.msra.mxu0 0.0
    %396 = vmatprep.subr.mxu0 0.0
    %397 = vmatpush1.xpose.msra.mxu0 0.0
    %398 = vmatprep.subr.mxu0 0.0
    %399 = vmatpush1.xpose.msra.mxu0 0.0
    %400 = vmatprep.subr.mxu0 0.0
    %401 = vmatpush1.xpose.msra.mxu0 0.0
    %402 = vmatprep.subr.mxu0 0.0
    %403 = vmatpush1.xpose.msra.mxu0 0.0
    %404 = vmatprep.subr.mxu0 0.0
    %405 = vmatpush1.xpose.msra.mxu0 0.0
    %406 = vmatprep.subr.mxu0 0.0
    %407 = vmatpush1.xpose.msra.mxu0 0.0
    %408 = vmatprep.subr.mxu0 0.0
    %409 = vmatpush1.xpose.msra.mxu0 0.0
    %410 = vmatprep.subr.mxu0 0.0
    %411 = vmatpush1.xpose.msra.mxu0 0.0
    %412 = vmatprep.subr.mxu0 0.0
    %413 = vmatpush1.xpose.msra.mxu0 0.0
    %414 = vmatprep.subr.mxu0 0.0
    %415 = vmatpush1.xpose.msra.mxu0 0.0
    %416 = vmatprep.subr.mxu0 0.0
    %417 = vmatpush1.xpose.msra.mxu0 0.0
    %418 = vmatprep.subr.mxu0 0.0
    %419 = vmatpush1.xpose.msra.mxu0 0.0
    %420 = vmatprep.subr.mxu0 0.0
    %421 = vmatpush1.xpose.msra.mxu0 0.0
    %422 = vmatprep.subr.mxu0 0.0
    %423 = vmatpush1.xpose.msra.mxu0 0.0
    %424 = vmatprep.subr.mxu0 0.0
    %425 = vmatpush1.xpose.msra.mxu0 0.0
    %426 = vmatprep.subr.mxu0 0.0
    %427 = vmatpush1.xpose.msra.mxu0 0.0
    %428 = vmatprep.subr.mxu0 0.0
    %429 = vmatpush1.xpose.msra.mxu0 0.0
    %430 = vmatprep.subr.mxu0 0.0
    %431 = vmatpush1.xpose.msra.mxu0 0.0
    %432 = vmatprep.subr.mxu0 0.0
    %433 = vmatpush1.xpose.msra.mxu0 0.0
    %434 = vmatprep.subr.mxu0 0.0
    %435 = vmatpush1.xpose.msra.mxu0 0.0
    %436 = vmatprep.subr.mxu0 0.0
    %437 = vmatpush1.xpose.msra.mxu0 0.0
    %438 = vmatprep.mubr.f32.mxu0 0.0
    %439 = vmatmul.mubr.f32.gmra.mrb[0].mxu0 %v370
    %v440 = vpop.f32.mrb[0].mxu0
    %v441 = vadd.f32 %v365, %v440
    %v442 = vpop.f32.mrb[0].mxu0
    %443 = vdwg.mxu0
    %v444 = vsel %vm303, %v441, -1e+18
    %v445 = vsel %vm305, %v444, -inf
    %446 = vmax.xlane.f32.xlu0 %v445
    %v447 = vpop.xlane.xlu0 %446
    %v448 = vsub.f32 %v444, %v447
    %v449 = vmul.f32 %v448, 1.442695
    %v450 = vpow.pop %v449
    %v451 = vsel %vm305, %v450, 0.0
    %452 = vadd.xlane.f32.xlu0 %v451
    %v453 = vpop.xlane.xlu0 %452
    %v454 = vrcp.pop %v453
    %v455 = vmul.f32 %v453, %v454
    %v456 = vsub.f32 2.0, %v455
    %v457 = vmul.f32 %v454, %v456
    %v458 = vmul.f32 %v450, %v457
    %459 = vst.msk [vmem:[%s5] sm:$0xff] %vm305, %v458
    %461 = vset.pattern.permute.xlu0 0
    %462 = vperm.xlu0 %461, %v167
    %v463 = vpop.permute.xlu0 %462
    %v465 = vsel %vm169, %v463, 0.0
    %466 = vset.pattern.permute.xlu0 1
    %467 = vperm.xlu0 %466, %v167
    %v468 = vpop.permute.xlu0 %467
    %v470 = vsel %vm176, %v468, %v465
    %471 = vset.pattern.permute.xlu0 2
    %472 = vperm.xlu0 %471, %v167
    %v473 = vpop.permute.xlu0 %472
    %v475 = vsel %vm182, %v473, %v470
    %476 = vset.pattern.permute.xlu0 3
    %477 = vperm.xlu0 %476, %v167
    %v478 = vpop.permute.xlu0 %477
    %v480 = vsel %vm188, %v478, %v475
    %481 = vset.pattern.permute.xlu0 4
    %482 = vperm.xlu0 %481, %v167
    %v483 = vpop.permute.xlu0 %482
    %v485 = vsel %vm194, %v483, %v480
    %486 = vset.pattern.permute.xlu0 5
    %487 = vperm.xlu0 %486, %v167
    %v488 = vpop.permute.xlu0 %487
    %v490 = vsel %vm200, %v488, %v485
    %491 = vset.pattern.permute.xlu0 6
    %492 = vperm.xlu0 %491, %v167
    %v493 = vpop.permute.xlu0 %492
    %v495 = vsel %vm206, %v493, %v490
    %496 = vset.pattern.permute.xlu0 7
    %497 = vperm.xlu0 %496, %v167
    %v498 = vpop.permute.xlu0 %497
    %v500 = vsel %vm212, %v498, %v495
    %501 = vset.pattern.permute.xlu0 8
    %502 = vperm.xlu0 %501, %v167
    %v503 = vpop.permute.xlu0 %502
    %v505 = vsel %vm218, %v503, %v500
    %507 = vrot.lane.b32.xlu0 %v165, 96
    %v508 = vpop.permute.xlu0 %507
    %v509 = vsel %vm85, %v165, 0
    %v511 = vsel %vm85, %v508, 0
    %513 = vmatprep.subr.mxu0 0.0
    %514 = vmatpush1.xpose.msra.mxu0 %v511
    %515 = vmatprep.subr.mxu0 0.0
    %516 = vmatpush1.xpose.msra.mxu0 0.0
    %517 = vmatprep.subr.mxu0 0.0
    %518 = vmatpush1.xpose.msra.mxu0 0.0
    %519 = vmatprep.subr.mxu0 0.0
    %520 = vmatpush1.xpose.msra.mxu0 0.0
    %521 = vmatprep.subr.mxu0 0.0
    %522 = vmatpush1.xpose.msra.mxu0 0.0
    %523 = vmatprep.subr.mxu0 0.0
    %524 = vmatpush1.xpose.msra.mxu0 0.0
    %525 = vmatprep.subr.mxu0 0.0
    %526 = vmatpush1.xpose.msra.mxu0 0.0
    %527 = vmatprep.subr.mxu0 0.0
    %528 = vmatpush1.xpose.msra.mxu0 0.0
    %529 = vmatprep.subr.mxu0 0.0
    %530 = vmatpush1.xpose.msra.mxu0 0.0
    %531 = vmatprep.subr.mxu0 0.0
    %532 = vmatpush1.xpose.msra.mxu0 0.0
    %533 = vmatprep.subr.mxu0 0.0
    %534 = vmatpush1.xpose.msra.mxu0 0.0
    %535 = vmatprep.subr.mxu0 0.0
    %536 = vmatpush1.xpose.msra.mxu0 0.0
    %537 = vmatprep.subr.mxu0 0.0
    %538 = vmatpush1.xpose.msra.mxu0 0.0
    %539 = vmatprep.subr.mxu0 0.0
    %540 = vmatpush1.xpose.msra.mxu0 0.0
    %541 = vmatprep.subr.mxu0 0.0
    %542 = vmatpush1.xpose.msra.mxu0 0.0
    %543 = vmatprep.subr.mxu0 0.0
    %544 = vmatpush1.xpose.msra.mxu0 0.0
    %545 = vmatprep.subr.mxu0 0.0
    %546 = vmatpush1.xpose.msra.mxu0 0.0
    %547 = vmatprep.subr.mxu0 0.0
    %548 = vmatpush1.xpose.msra.mxu0 0.0
    %549 = vmatprep.subr.mxu0 0.0
    %550 = vmatpush1.xpose.msra.mxu0 0.0
    %551 = vmatprep.subr.mxu0 0.0
    %552 = vmatpush1.xpose.msra.mxu0 0.0
    %553 = vmatprep.subr.mxu0 0.0
    %554 = vmatpush1.xpose.msra.mxu0 0.0
    %555 = vmatprep.subr.mxu0 0.0
    %556 = vmatpush1.xpose.msra.mxu0 0.0
    %557 = vmatprep.subr.mxu0 0.0
    %558 = vmatpush1.xpose.msra.mxu0 0.0
    %559 = vmatprep.subr.mxu0 0.0
    %560 = vmatpush1.xpose.msra.mxu0 0.0
    %561 = vmatprep.subr.mxu0 0.0
    %562 = vmatpush1.xpose.msra.mxu0 0.0
    %563 = vmatprep.subr.mxu0 0.0
    %564 = vmatpush1.xpose.msra.mxu0 0.0
    %565 = vmatprep.subr.mxu0 0.0
    %566 = vmatpush1.xpose.msra.mxu0 0.0
    %567 = vmatprep.subr.mxu0 0.0
    %568 = vmatpush1.xpose.msra.mxu0 0.0
    %569 = vmatprep.subr.mxu0 0.0
    %570 = vmatpush1.xpose.msra.mxu0 0.0
    %571 = vmatprep.subr.mxu0 0.0
    %572 = vmatpush1.xpose.msra.mxu0 0.0
    %573 = vmatprep.subr.mxu0 0.0
    %574 = vmatpush1.xpose.msra.mxu0 0.0
    %575 = vmatprep.subr.mxu0 0.0
    %576 = vmatpush1.xpose.msra.mxu0 0.0
    %577 = vmatprep.mubr.f32.mxu0 0.0
    %578 = vmatmul.mubr.f32.gmra.mrb[0].mxu0 %v509
    %v579 = vpop.f32.mrb[0].mxu0
    %v580 = vadd.f32 %v505, %v579
    %v581 = vpop.f32.mrb[0].mxu0
    %582 = vdwg.mxu0
    %v583 = vsel %vm63, 16843009, 0
    %v584 = vunpack.c.0.s8 %v583
    %vm585 = vcmp.ne.s32.totalorder %v584, 0
    %v586 = vsel %vm585, %v580, -1e+18
    %v587 = vsel %vm305, %v586, -inf
    %588 = vmax.xlane.f32.xlu0 %v587
    %v589 = vpop.xlane.xlu0 %588
    %v590 = vsub.f32 %v586, %v589
    %v591 = vmul.f32 %v590, 1.442695
    %v592 = vpow.pop %v591
    %v593 = vsel %vm305, %v592, 0.0
    %594 = vadd.xlane.f32.xlu0 %v593
    %v595 = vpop.xlane.xlu0 %594
    %v596 = vrcp.pop %v595
    %v597 = vmul.f32 %v595, %v596
    %v598 = vsub.f32 2.0, %v597
    %v599 = vmul.f32 %v596, %v598
    %v600 = vmul.f32 %v592, %v599
    %601 = vst.msk [vmem:[%s4 + $0x8] sm:$0xff] %vm305, %v600
    %602 = vset.pattern.permute.xlu0 9
    %603 = vperm.xlu0 %602, %v167
    %v604 = vpop.permute.xlu0 %603
    %v606 = vsel %vm169, %v604, 0.0
    %607 = vset.pattern.permute.xlu0 10
    %608 = vperm.xlu0 %607, %v167
    %v609 = vpop.permute.xlu0 %608
    %v611 = vsel %vm176, %v609, %v606
    %612 = vset.pattern.permute.xlu0 11
    %613 = vperm.xlu0 %612, %v167
    %v614 = vpop.permute.xlu0 %613
    %v616 = vsel %vm182, %v614, %v611
    %617 = vset.pattern.permute.xlu0 12
    %618 = vperm.xlu0 %617, %v167
    %v619 = vpop.permute.xlu0 %618
    %v621 = vsel %vm188, %v619, %v616
    %622 = vset.pattern.permute.xlu0 13
    %623 = vperm.xlu0 %622, %v167
    %v624 = vpop.permute.xlu0 %623
    %v626 = vsel %vm194, %v624, %v621
    %627 = vset.pattern.permute.xlu0 14
    %628 = vperm.xlu0 %627, %v167
    %v629 = vpop.permute.xlu0 %628
    %v631 = vsel %vm200, %v629, %v626
    %632 = vset.pattern.permute.xlu0 15
    %633 = vperm.xlu0 %632, %v167
    %v634 = vpop.permute.xlu0 %633
    %v636 = vsel %vm206, %v634, %v631
    %637 = vset.pattern.permute.xlu0 16
    %638 = vperm.xlu0 %637, %v167
    %v639 = vpop.permute.xlu0 %638
    %v641 = vsel %vm212, %v639, %v636
    %642 = vset.pattern.permute.xlu0 17
    %643 = vperm.xlu0 %642, %v167
    %v644 = vpop.permute.xlu0 %643
    %v646 = vsel %vm218, %v644, %v641
    %647 = vrot.lane.b32.xlu0 %v165, 64
    %v648 = vpop.permute.xlu0 %647
    %649 = vrot.lane.b32.xlu0 %v165, 32
    %v650 = vpop.permute.xlu0 %649
    %v651 = vsel %vm85, %v648, 0
    %v653 = vsel %vm85, %v650, 0
    %655 = vmatprep.subr.mxu0 0.0
    %656 = vmatpush1.xpose.msra.mxu0 %v653
    %657 = vmatprep.subr.mxu0 0.0
    %658 = vmatpush1.xpose.msra.mxu0 0.0
    %659 = vmatprep.subr.mxu0 0.0
    %660 = vmatpush1.xpose.msra.mxu0 0.0
    %661 = vmatprep.subr.mxu0 0.0
    %662 = vmatpush1.xpose.msra.mxu0 0.0
    %663 = vmatprep.subr.mxu0 0.0
    %664 = vmatpush1.xpose.msra.mxu0 0.0
    %665 = vmatprep.subr.mxu0 0.0
    %666 = vmatpush1.xpose.msra.mxu0 0.0
    %667 = vmatprep.subr.mxu0 0.0
    %668 = vmatpush1.xpose.msra.mxu0 0.0
    %669 = vmatprep.subr.mxu0 0.0
    %670 = vmatpush1.xpose.msra.mxu0 0.0
    %671 = vmatprep.subr.mxu0 0.0
    %672 = vmatpush1.xpose.msra.mxu0 0.0
    %673 = vmatprep.subr.mxu0 0.0
    %674 = vmatpush1.xpose.msra.mxu0 0.0
    %675 = vmatprep.subr.mxu0 0.0
    %676 = vmatpush1.xpose.msra.mxu0 0.0
    %677 = vmatprep.subr.mxu0 0.0
    %678 = vmatpush1.xpose.msra.mxu0 0.0
    %679 = vmatprep.subr.mxu0 0.0
    %680 = vmatpush1.xpose.msra.mxu0 0.0
    %681 = vmatprep.subr.mxu0 0.0
    %682 = vmatpush1.xpose.msra.mxu0 0.0
    %683 = vmatprep.subr.mxu0 0.0
    %684 = vmatpush1.xpose.msra.mxu0 0.0
    %685 = vmatprep.subr.mxu0 0.0
    %686 = vmatpush1.xpose.msra.mxu0 0.0
    %687 = vmatprep.subr.mxu0 0.0
    %688 = vmatpush1.xpose.msra.mxu0 0.0
    %689 = vmatprep.subr.mxu0 0.0
    %690 = vmatpush1.xpose.msra.mxu0 0.0
    %691 = vmatprep.subr.mxu0 0.0
    %692 = vmatpush1.xpose.msra.mxu0 0.0
    %693 = vmatprep.subr.mxu0 0.0
    %694 = vmatpush1.xpose.msra.mxu0 0.0
    %695 = vmatprep.subr.mxu0 0.0
    %696 = vmatpush1.xpose.msra.mxu0 0.0
    %697 = vmatprep.subr.mxu0 0.0
    %698 = vmatpush1.xpose.msra.mxu0 0.0
    %699 = vmatprep.subr.mxu0 0.0
    %700 = vmatpush1.xpose.msra.mxu0 0.0
    %701 = vmatprep.subr.mxu0 0.0
    %702 = vmatpush1.xpose.msra.mxu0 0.0
    %703 = vmatprep.subr.mxu0 0.0
    %704 = vmatpush1.xpose.msra.mxu0 0.0
    %705 = vmatprep.subr.mxu0 0.0
    %706 = vmatpush1.xpose.msra.mxu0 0.0
    %707 = vmatprep.subr.mxu0 0.0
    %708 = vmatpush1.xpose.msra.mxu0 0.0
    %709 = vmatprep.subr.mxu0 0.0
    %710 = vmatpush1.xpose.msra.mxu0 0.0
    %711 = vmatprep.subr.mxu0 0.0
    %712 = vmatpush1.xpose.msra.mxu0 0.0
    %713 = vmatprep.subr.mxu0 0.0
    %714 = vmatpush1.xpose.msra.mxu0 0.0
    %715 = vmatprep.subr.mxu0 0.0
    %716 = vmatpush1.xpose.msra.mxu0 0.0
    %717 = vmatprep.subr.mxu0 0.0
    %718 = vmatpush1.xpose.msra.mxu0 0.0
    %719 = vmatprep.mubr.f32.mxu0 0.0
    %720 = vmatmul.mubr.f32.gmra.mrb[0].mxu0 %v651
    %v721 = vpop.f32.mrb[0].mxu0
    %v722 = vadd.f32 %v646, %v721
    %v723 = vpop.f32.mrb[0].mxu0
    %724 = vdwg.mxu0
    %v725 = vsel %vm585, %v722, -1e+18
    %v726 = vsel %vm305, %v725, -inf
    %727 = vmax.xlane.f32.xlu0 %v726
    %v728 = vpop.xlane.xlu0 %727
    %v729 = vsub.f32 %v725, %v728
    %v730 = vmul.f32 %v729, 1.442695
    %v731 = vpow.pop %v730
    %v732 = vsel %vm305, %v731, 0.0
    %733 = vadd.xlane.f32.xlu0 %v732
    %v734 = vpop.xlane.xlu0 %733
    %v735 = vrcp.pop %v734
    %v736 = vmul.f32 %v734, %v735
    %v737 = vsub.f32 2.0, %v736
    %v738 = vmul.f32 %v735, %v737
    %v739 = vmul.f32 %v731, %v738
    %740 = vst.msk [vmem:[%s5 + $0x8] sm:$0xff] %vm305, %v739
    // Predicated region
    $region26: #{tpu_custom_call.1} parent=1 // pred_check
      _
    $region27: #{tpu_custom_call.1} parent=1 // pred_check_branch
      %742 = sbr.rel (0) target = $region29
    $region28: #{tpu_custom_call.1} parent=1 // pred_region
      _
    $region29: #{tpu_custom_call.1} parent=1 // pred_fallthru
      _
    // Predicated region
    $region30: #{tpu_custom_call.1} parent=1 // pred_check
      _
    $region31: #{tpu_custom_call.1} parent=1 // pred_check_branch
      %744 = sbr.rel (0) target = $region33
    $region32: #{tpu_custom_call.1} parent=1 // pred_region
      _
    $region33: #{tpu_custom_call.1} parent=1 // pred_fallthru
      _
    // Predicated region
    $region34: #{tpu_custom_call.1} parent=1 // pred_check
      _
    $region35: #{tpu_custom_call.1} parent=1 // pred_check_branch
      %746 = sbr.rel (0) target = $region37
    $region36: #{tpu_custom_call.1} parent=1 // pred_region
      _
    $region37: #{tpu_custom_call.1} parent=1 // pred_fallthru
      _
    // Predicated region
    $region38: #{tpu_custom_call.1} parent=1 // pred_check
      _
    $region39: #{tpu_custom_call.1} parent=1 // pred_check_branch
      %748 = sbr.rel (0) target = $region41
    $region40: #{tpu_custom_call.1} parent=1 // pred_region
      _
    $region41: #{tpu_custom_call.1} parent=1 // pred_fallthru
      _
    %749 = vsyncpa [#allocation3], 1
    %750 = vsyncpa [#allocation5], 1

</llo_original>
